<compile_context>
chip_gen: v6e
topology: v6e:2x2x1
jax: 0.10.0
libtpu: 0.0.40
codegen_flags: <defaults>
</compile_context>

<pallas_src>
import jax
import jax.numpy as jnp
from jax.experimental import pallas as pl
from jax.experimental.pallas import tpu as pltpu


def _round_up(n, m):
    return ((n + m - 1) // m) * m


def _default_num_batch_blocks():
    """v7x has 2 TensorCores per chip -> keep >=2 parallel grid steps there.
    v5e / v6e have a single TC -> one big block minimizes per-step overhead."""
    try:
        kind = jax.devices()[0].device_kind.lower()
    except Exception:
        return 1
    return 2 if ("v7" in kind or "tpu7" in kind) else 1


def qnet_kernel(x_ref, w1_ref, b1_ref, w2_ref, b2_ref, w3_ref, b3_ref, o_ref):
    # fc1 + relu: in-kernel bf16 cast of x (weights already bf16), f32 accumulate.
    x = x_ref[...].astype(jnp.bfloat16)
    h1 = jnp.dot(x, w1_ref[...], preferred_element_type=jnp.float32)
    h1 = jnp.maximum(h1 + b1_ref[...], 0.0)
    # fc2 + relu
    h2 = jnp.dot(h1.astype(jnp.bfloat16), w2_ref[...],
                 preferred_element_type=jnp.float32)
    h2 = jnp.maximum(h2 + b2_ref[...], 0.0)
    # fc3 (no activation), bias epilogue in f32.
    out = jnp.dot(h2.astype(jnp.bfloat16), w3_ref[...],
                  preferred_element_type=jnp.float32)
    o_ref[...] = (out + b3_ref[...]).astype(o_ref.dtype)


def prepare_params(w1, b1, w2, b2, w3, b3):
    """One-time parameter prep: pad the hidden dim to a multiple of 128 and cast
    weights to bf16.  Returned arrays are reused across every forward call, so no
    pad/convert work appears on the per-call path.  Zero pads are numerically
    inert (zero weight rows/cols, zero bias pads, ReLU(0)=0)."""
    S, H = w1.shape
    A = w3.shape[1]
    Hpad = _round_up(H, 128)   # 200 -> 256: full MXU/lane tiles for the hidden dim

    def pad2(a, r, c):
        return jnp.pad(a, ((0, r - a.shape[0]), (0, c - a.shape[1])))

    w1b = pad2(w1, S, Hpad).astype(jnp.bfloat16)
    w2b = pad2(w2, Hpad, Hpad).astype(jnp.bfloat16)
    w3b = pad2(w3, Hpad, A).astype(jnp.bfloat16)
    b1p = pad2(b1, 1, Hpad)    # biases stay f32 for the VPU epilogue
    b2p = pad2(b2, 1, Hpad)
    b3p = b3                   # (1, A): already lane-exact, stays f32
    return tuple(jax.device_put(a) for a in (w1b, b1p, w2b, b2p, w3b, b3p))


def qnetwork_forward(x, prepared_params, *, num_batch_blocks=None):
    """Forward pass of the 3-layer MLP Q-network.

    x: [B, S] float32; prepared_params from prepare_params().  Returns [B, A] f32.
    """
    w1b, b1p, w2b, b2p, w3b, b3p = prepared_params
    B, S = x.shape
    Hpad = w1b.shape[1]
    A = w3b.shape[1]

    if num_batch_blocks is None:
        num_batch_blocks = _default_num_batch_blocks()
    # Keep TB a multiple of 8 (sublane rule); never ask for more blocks than
    # 8-row chunks available.
    nb = max(1, min(num_batch_blocks, max(1, B // 8)))
    TB = _round_up(-(-B // nb), 8)
    Bpad = _round_up(B, TB)
    nsteps = Bpad // TB

    xb = x if Bpad == B else jnp.pad(x, ((0, Bpad - B), (0, 0)))

    flops = 2 * Bpad * (S * Hpad + Hpad * Hpad + Hpad * A)
    bytes_accessed = (xb.size * 4
                      + (w1b.size + w2b.size + w3b.size) * 2
                      + (b1p.size + b2p.size + b3p.size) * 4
                      + Bpad * A * 4)

    out = pl.pallas_call(
        qnet_kernel,
        out_shape=jax.ShapeDtypeStruct((Bpad, A), jnp.float32),
        grid=(nsteps,),
        in_specs=[
            # x blocked over batch; S = full array dim (no padding needed).
            pl.BlockSpec((TB, S), lambda i: (i, 0)),
            # weights / biases: constant index_map -> DMA'd once, VMEM-resident.
            pl.BlockSpec((S, Hpad), lambda i: (0, 0)),
            pl.BlockSpec((1, Hpad), lambda i: (0, 0)),
            pl.BlockSpec((Hpad, Hpad), lambda i: (0, 0)),
            pl.BlockSpec((1, Hpad), lambda i: (0, 0)),
            pl.BlockSpec((Hpad, A), lambda i: (0, 0)),
            pl.BlockSpec((1, A), lambda i: (0, 0)),
        ],
        out_specs=pl.BlockSpec((TB, A), lambda i: (i, 0)),
        compiler_params=pltpu.CompilerParams(
            dimension_semantics=("parallel",)),
        cost_estimate=pl.CostEstimate(
            flops=flops, transcendentals=0, bytes_accessed=bytes_accessed),
    )(xb, w1b, b1p, w2b, b2p, w3b, b3p)

    return out if Bpad == B else out[:B]


def init_params(key, state_size, hidden_size, action_size):
    """Deterministic synthetic parameters (PyTorch-style uniform fan-in init),
    stored as [in, out] (transposed from nn.Linear's [out, in])."""
    ks = jax.random.split(key, 6)

    def linear(kw, kb, fan_in, fan_out):
        bound = 1.0 / jnp.sqrt(fan_in)
        w = jax.random.uniform(kw, (fan_in, fan_out), jnp.float32, -bound, bound)
        b = jax.random.uniform(kb, (1, fan_out), jnp.float32, -bound, bound)
        return w, b

    w1, b1 = linear(ks[0], ks[1], state_size, hidden_size)
    w2, b2 = linear(ks[2], ks[3], hidden_size, hidden_size)
    w3, b3 = linear(ks[4], ks[5], hidden_size, action_size)
    return w1, b1, w2, b2, w3, b3


def reference_forward(x, w1, b1, w2, b2, w3, b3):
    h1 = jnp.maximum(x @ w1 + b1, 0.0)
    h2 = jnp.maximum(h1 @ w2 + b2, 0.0)
    return h2 @ w3 + b3


if __name__ == "__main__":
    # state -> hidden(200, module default) -> hidden -> action.
    BATCH = 64
    STATE_SIZE = 64
    HIDDEN_SIZE = 200
    ACTION_SIZE = 64

    key = jax.random.PRNGKey(0)
    kx, kp = jax.random.split(key)
    x = jax.random.normal(kx, (BATCH, STATE_SIZE), jnp.float32)
    params = init_params(kp, STATE_SIZE, HIDDEN_SIZE, ACTION_SIZE)

    prepared = prepare_params(*params)          # one-time pad + bf16 cast
    prepared = jax.block_until_ready(prepared)

    out = qnetwork_forward(x, prepared)
    out = jax.block_until_ready(out)

    ref = reference_forward(x, *params)
    assert out.shape == (BATCH, ACTION_SIZE)
    # bf16 matmuls with f32 accumulation -> looser tolerance than pure f32.
    err = float(jnp.max(jnp.abs(out - ref)))
    assert jnp.allclose(out, ref, atol=2e-2, rtol=2e-2), err

    print("KERNEL_OK")
</pallas_src>

<mosaic_0001>
module attributes {stable_mosaic.version = 11 : i64} {
  func.func @qnet_kernel(%arg0: i32, %arg1: memref<64x64xf32, #tpu.memory_space<vmem>>, %arg2: memref<64x256xbf16, #tpu.memory_space<vmem>>, %arg3: memref<1x256xf32, #tpu.memory_space<vmem>>, %arg4: memref<256x256xbf16, #tpu.memory_space<vmem>>, %arg5: memref<1x256xf32, #tpu.memory_space<vmem>>, %arg6: memref<256x64xbf16, #tpu.memory_space<vmem>>, %arg7: memref<1x64xf32, #tpu.memory_space<vmem>>, %arg8: memref<64x64xf32, #tpu.memory_space<vmem>>) attributes {dimension_semantics = [#tpu.dimension_semantics<parallel>], iteration_bounds = array<i64: 1>, scalar_prefetch = 0 : i64, scratch_operands = 0 : i64, tpu.core_type = #tpu.core_type<tc>, window_params = [{transform_indices = @transform_0, window_bounds = array<i64: 64, 64>}, {pipeline_mode = #tpu.pipeline_mode<synchronous>, transform_indices = @transform_1, window_bounds = array<i64: 64, 256>}, {pipeline_mode = #tpu.pipeline_mode<synchronous>, transform_indices = @transform_2, window_bounds = array<i64: 1, 256>}, {pipeline_mode = #tpu.pipeline_mode<synchronous>, transform_indices = @transform_3, window_bounds = array<i64: 256, 256>}, {pipeline_mode = #tpu.pipeline_mode<synchronous>, transform_indices = @transform_4, window_bounds = array<i64: 1, 256>}, {pipeline_mode = #tpu.pipeline_mode<synchronous>, transform_indices = @transform_5, window_bounds = array<i64: 256, 64>}, {pipeline_mode = #tpu.pipeline_mode<synchronous>, transform_indices = @transform_6, window_bounds = array<i64: 1, 64>}, {transform_indices = @transform_7, window_bounds = array<i64: 64, 64>}]} {
    %c0 = arith.constant 0 : index
    %c0_0 = arith.constant 0 : index
    %0 = vector.load %arg1[%c0, %c0_0] : memref<64x64xf32, #tpu.memory_space<vmem>>, vector<64x64xf32>
    %1 = arith.truncf %0 : vector<64x64xf32> to vector<64x64xbf16>
    %c0_1 = arith.constant 0 : index
    %c0_2 = arith.constant 0 : index
    %2 = vector.load %arg2[%c0_1, %c0_2] : memref<64x256xbf16, #tpu.memory_space<vmem>>, vector<64x256xbf16>
    %cst = arith.constant dense<0.000000e+00> : vector<64x256xf32>
    %3 = tpu.matmul %1, %2, %cst {dimension_numbers = #tpu.dot_dimension_numbers<[1], [0], [0], [1], [0, 0, 1, 1], [], []>} : vector<64x64xbf16>, vector<64x256xbf16>, vector<64x256xf32> -> vector<64x256xf32>
    %c0_3 = arith.constant 0 : index
    %c0_4 = arith.constant 0 : index
    %4 = vector.load %arg3[%c0_3, %c0_4] : memref<1x256xf32, #tpu.memory_space<vmem>>, vector<1x256xf32>
    %5 = vector.broadcast %4 : vector<1x256xf32> to vector<64x256xf32>
    %6 = arith.addf %3, %5 : vector<64x256xf32>
    %cst_5 = arith.constant 0.000000e+00 : f32
    %7 = vector.broadcast %cst_5 : f32 to vector<64x256xf32>
    %8 = arith.maximumf %6, %7 : vector<64x256xf32>
    %9 = arith.truncf %8 : vector<64x256xf32> to vector<64x256xbf16>
    %c0_6 = arith.constant 0 : index
    %c0_7 = arith.constant 0 : index
    %10 = vector.load %arg4[%c0_6, %c0_7] : memref<256x256xbf16, #tpu.memory_space<vmem>>, vector<256x256xbf16>
    %cst_8 = arith.constant dense<0.000000e+00> : vector<64x256xf32>
    %11 = tpu.matmul %9, %10, %cst_8 {dimension_numbers = #tpu.dot_dimension_numbers<[1], [0], [0], [1], [0, 0, 1, 1], [], []>} : vector<64x256xbf16>, vector<256x256xbf16>, vector<64x256xf32> -> vector<64x256xf32>
    %c0_9 = arith.constant 0 : index
    %c0_10 = arith.constant 0 : index
    %12 = vector.load %arg5[%c0_9, %c0_10] : memref<1x256xf32, #tpu.memory_space<vmem>>, vector<1x256xf32>
    %13 = vector.broadcast %12 : vector<1x256xf32> to vector<64x256xf32>
    %14 = arith.addf %11, %13 : vector<64x256xf32>
    %cst_11 = arith.constant 0.000000e+00 : f32
    %15 = vector.broadcast %cst_11 : f32 to vector<64x256xf32>
    %16 = arith.maximumf %14, %15 : vector<64x256xf32>
    %17 = arith.truncf %16 : vector<64x256xf32> to vector<64x256xbf16>
    %c0_12 = arith.constant 0 : index
    %c0_13 = arith.constant 0 : index
    %18 = vector.load %arg6[%c0_12, %c0_13] : memref<256x64xbf16, #tpu.memory_space<vmem>>, vector<256x64xbf16>
    %cst_14 = arith.constant dense<0.000000e+00> : vector<64x64xf32>
    %19 = tpu.matmul %17, %18, %cst_14 {dimension_numbers = #tpu.dot_dimension_numbers<[1], [0], [0], [1], [0, 0, 1, 1], [], []>} : vector<64x256xbf16>, vector<256x64xbf16>, vector<64x64xf32> -> vector<64x64xf32>
    %c0_15 = arith.constant 0 : index
    %c0_16 = arith.constant 0 : index
    %20 = vector.load %arg7[%c0_15, %c0_16] : memref<1x64xf32, #tpu.memory_space<vmem>>, vector<1x64xf32>
    %21 = vector.broadcast %20 : vector<1x64xf32> to vector<64x64xf32>
    %22 = arith.addf %19, %21 : vector<64x64xf32>
    %c0_17 = arith.constant 0 : index
    %c0_18 = arith.constant 0 : index
    %23 = vector.load %arg8[%c0_17, %c0_18] : memref<64x64xf32, #tpu.memory_space<vmem>>, vector<64x64xf32>
    tpu.vector_store %arg8[%c0_17, %c0_18], %22 {strides = array<i32>} : memref<64x64xf32, #tpu.memory_space<vmem>>, vector<64x64xf32>,
    return
  }
  func.func @transform_0(%arg0: i32) -> (i32, i32) {
    %c0_i32 = arith.constant 0 : i32
    %c0_i32_0 = arith.constant 0 : i32
    return %arg0, %c0_i32 : i32, i32
  }
  func.func @transform_1(%arg0: i32) -> (i32, i32) {
    %c0_i32 = arith.constant 0 : i32
    %c0_i32_0 = arith.constant 0 : i32
    %c0_i32_1 = arith.constant 0 : i32
    return %c0_i32, %c0_i32_0 : i32, i32
  }
  func.func @transform_2(%arg0: i32) -> (i32, i32) {
    %c0_i32 = arith.constant 0 : i32
    %c0_i32_0 = arith.constant 0 : i32
    %c0_i32_1 = arith.constant 0 : i32
    return %c0_i32, %c0_i32_0 : i32, i32
  }
  func.func @transform_3(%arg0: i32) -> (i32, i32) {
    %c0_i32 = arith.constant 0 : i32
    %c0_i32_0 = arith.constant 0 : i32
    %c0_i32_1 = arith.constant 0 : i32
    return %c0_i32, %c0_i32_0 : i32, i32
  }
  func.func @transform_4(%arg0: i32) -> (i32, i32) {
    %c0_i32 = arith.constant 0 : i32
    %c0_i32_0 = arith.constant 0 : i32
    %c0_i32_1 = arith.constant 0 : i32
    return %c0_i32, %c0_i32_0 : i32, i32
  }
  func.func @transform_5(%arg0: i32) -> (i32, i32) {
    %c0_i32 = arith.constant 0 : i32
    %c0_i32_0 = arith.constant 0 : i32
    %c0_i32_1 = arith.constant 0 : i32
    return %c0_i32, %c0_i32_0 : i32, i32
  }
  func.func @transform_6(%arg0: i32) -> (i32, i32) {
    %c0_i32 = arith.constant 0 : i32
    %c0_i32_0 = arith.constant 0 : i32
    %c0_i32_1 = arith.constant 0 : i32
    return %c0_i32, %c0_i32_0 : i32, i32
  }
  func.func @transform_7(%arg0: i32) -> (i32, i32) {
    %c0_i32 = arith.constant 0 : i32
    %c0_i32_0 = arith.constant 0 : i32
    return %arg0, %c0_i32 : i32, i32
  }
}

</mosaic_0001>

<llo_original>
// kernel: tpu_custom_call.1
$region0: #{tpu_custom_call.1}
  #allocation0 [shape = 'u32[]', space=smem, size = 0x4, offset = 0x4, fixed_abs, tag = 'smem constant byte address 0x4 - core index']
  #allocation1 [shape = 'u32[144,128]{1,0:T(1,128)}', space=vmem, size = 0x12000, scoped, tag = 'internal scratch']
  %s0 = inlined_call_operand.vmem [shape: f32[64,64], index: 0, kind: input, shape index: {}]
  %s1 = inlined_call_operand.vmem [shape: bf16[64,256], index: 1, kind: input, shape index: {}]
  %s2 = inlined_call_operand.vmem [shape: f32[1,256], index: 2, kind: input, shape index: {}]
  %s3 = inlined_call_operand.hbm [shape: bf16[256,256], index: 3, kind: input, shape index: {}]
  %s4 = inlined_call_operand.vmem [shape: f32[1,256], index: 4, kind: input, shape index: {}]
  %s5 = inlined_call_operand.vmem [shape: bf16[256,64], index: 5, kind: input, shape index: {}]
  %s6 = inlined_call_operand.vmem [shape: f32[1,64], index: 6, kind: input, shape index: {}]
  %s7 = inlined_call_operand.hbm [shape: f32[64,64], index: 7, kind: output, shape index: {}]
  %s8 = sld [smem:[#allocation0]]
  $region42: #{tpu_custom_call.1} parent=0
    _
  %s10 = ssub.s32 1, %s8
  %s11 = scalar_select 0, %s10, %s8
  $region1: #{tpu_custom_call.1} parent=0
    #allocation2 [shape = 'u8[131072]{0}', space=vmem, size = 0x20000, scoped, tag = 'input window, operand 3, single buffered']
    #allocation3 [shape = 's32[1]{0}', space=sflag, size = 0x4, scoped, tag = 'scoped memory for tpu_custom_call.1']
    #allocation4 [shape = 's32[1]{0}', space=sflag, size = 0x4, scoped, tag = 'scoped memory for tpu_custom_call.1']
    #allocation5 [shape = 'u8[32768]{0}', space=vmem, size = 0x8000, scoped, tag = 'output window, operand 0, single buffered']
    %12 = vsyncpa [#allocation3], 0
    %13 = vsyncpa [#allocation4], 0
    // Predicated region
    $region2: #{tpu_custom_call.1} parent=1 // pred_check
      _
    $region3: #{tpu_custom_call.1} parent=1 // pred_check_branch
      %15 = sbr.rel (0) target = $region5
    $region4: #{tpu_custom_call.1} parent=1 // pred_region
      _
    $region5: #{tpu_custom_call.1} parent=1 // pred_fallthru
      _
    // Predicated region
    $region6: #{tpu_custom_call.1} parent=1 // pred_check
      _
    $region7: #{tpu_custom_call.1} parent=1 // pred_check_branch
      %17 = sbr.rel (0) target = $region9
    $region8: #{tpu_custom_call.1} parent=1 // pred_region
      _
    $region9: #{tpu_custom_call.1} parent=1 // pred_fallthru
      _
    // Predicated region
    $region10: #{tpu_custom_call.1} parent=1 // pred_check
      _
    $region11: #{tpu_custom_call.1} parent=1 // pred_check_branch
      %19 = sbr.rel (0) target = $region13
    $region12: #{tpu_custom_call.1} parent=1 // pred_region
      _
    $region13: #{tpu_custom_call.1} parent=1 // pred_fallthru
      _
    // Predicated region
    $region14: #{tpu_custom_call.1} parent=1 // pred_check
      _
    $region15: #{tpu_custom_call.1} parent=1 // pred_check_branch
      %21 = sbr.rel (0) target = $region17
    $region16: #{tpu_custom_call.1} parent=1 // pred_region
      %s23 = ssub.s32 4096, 4096
      %24 = vsyncadd [#allocation3], %s23
      %s25 = sshll.u32 [#allocation2], 4
      %s26 = int_to_ptr.vmem [resolvable:$true] %s25
      %31 = dma.hbm_to_vmem [thread:$0]  %s3, 4096, %s26, [#allocation3], 128, 128, 8
    $region17: #{tpu_custom_call.1} parent=1 // pred_fallthru
      _
    // Predicated region
    $region18: #{tpu_custom_call.1} parent=1 // pred_check
      _
    $region19: #{tpu_custom_call.1} parent=1 // pred_check_branch
      %33 = sbr.rel (0) target = $region21
    $region20: #{tpu_custom_call.1} parent=1 // pred_region
      _
    $region21: #{tpu_custom_call.1} parent=1 // pred_fallthru
      _
    // Predicated region
    $region22: #{tpu_custom_call.1} parent=1 // pred_check
      _
    $region23: #{tpu_custom_call.1} parent=1 // pred_check_branch
      %35 = sbr.rel (0) target = $region25
    $region24: #{tpu_custom_call.1} parent=1 // pred_region
      _
    $region25: #{tpu_custom_call.1} parent=1 // pred_fallthru
      _
    // Predicated region
    $region26: #{tpu_custom_call.1} parent=1 // pred_check
      _
    $region27: #{tpu_custom_call.1} parent=1 // pred_check_branch
      %37 = sbr.rel (0) target = $region29
    $region28: #{tpu_custom_call.1} parent=1 // pred_region
      _
    $region29: #{tpu_custom_call.1} parent=1 // pred_fallthru
      _
    // Predicated region
    $region30: #{tpu_custom_call.1} parent=1 // pred_check
      _
    $region31: #{tpu_custom_call.1} parent=1 // pred_check_branch
      %39 = sbr.rel (0) target = $region33
    $region32: #{tpu_custom_call.1} parent=1 // pred_region
      %40 = dma.done [#allocation3], 4096
    $region33: #{tpu_custom_call.1} parent=1 // pred_fallthru
      _
    %v42 = vld [vmem:[%s0] sm:$0xff]
    %v43 = vld [vmem:[%s0 + $0x8] sm:$0xff]
    %v44 = vld [vmem:[%s0 + $0x10] sm:$0xff]
    %v45 = vld [vmem:[%s0 + $0x18] sm:$0xff]
    %v46 = vld [vmem:[%s0 + $0x20] sm:$0xff]
    %v47 = vld [vmem:[%s0 + $0x28] sm:$0xff]
    %v48 = vld [vmem:[%s0 + $0x30] sm:$0xff]
    %v49 = vld [vmem:[%s0 + $0x38] sm:$0xff]
    %v50 = vpack.c.bf16 %v43, %v42
    %v51 = vpack.c.bf16 %v45, %v44
    %v52 = vpack.c.bf16 %v47, %v46
    %v53 = vpack.c.bf16 %v49, %v48
    %v54 = vld [vmem:[%s1] sm:$0xff]
    %v55 = vld [vmem:[%s1 + $0x8] sm:$0xff]
    %v56 = vld [vmem:[%s1 + $0x10] sm:$0xff]
    %v57 = vld [vmem:[%s1 + $0x18] sm:$0xff]
    %v58 = vld [vmem:[%s1 + $0x20] sm:$0xff]
    %v59 = vld [vmem:[%s1 + $0x28] sm:$0xff]
    %v60 = vld [vmem:[%s1 + $0x30] sm:$0xff]
    %v61 = vld [vmem:[%s1 + $0x38] sm:$0xff]
    %v62 = vld [vmem:[%s2] sm:$0x3]
    %v64 = vlaneseq
    %v65 = vshrl.u32 %v64, 7
    %v66 = vsub.s32 0, %v65
    %v67 = vrot.slane %v62, %v66
    %v68 = vlaneseq
    %v69 = vshrl.u32 %v68, 7
    %v70 = vsub.s32 1, %v69
    %v71 = vrot.slane %v62, %v70
    %v82 = vunpack.c.l.b16 %v54
    %v83 = vunpack.c.h.b16 %v54
    %v84 = vunpack.c.l.b16 %v55
    %v85 = vunpack.c.h.b16 %v55
    %v86 = vunpack.c.l.b16 %v56
    %v87 = vunpack.c.h.b16 %v56
    %v88 = vunpack.c.l.b16 %v57
    %v89 = vunpack.c.h.b16 %v57
    %v90 = vunpack.c.l.b16 %v58
    %v91 = vunpack.c.h.b16 %v58
    %v92 = vunpack.c.l.b16 %v59
    %v93 = vunpack.c.h.b16 %v59
    %v94 = vunpack.c.l.b16 %v60
    %v95 = vunpack.c.h.b16 %v60
    %v96 = vunpack.c.l.b16 %v61
    %v97 = vunpack.c.h.b16 %v61
    %v98 = vpack.c.b16 %v84, %v82
    %v99 = vpack.c.b16 %v85, %v83
    %v100 = vpack.c.b16 %v88, %v86
    %v101 = vpack.c.b16 %v89, %v87
    %v102 = vpack.c.b16 %v92, %v90
    %v103 = vpack.c.b16 %v93, %v91
    %v104 = vpack.c.b16 %v96, %v94
    %v105 = vpack.c.b16 %v97, %v95
    %vm114 = vcmask 523264
    %v116 = vsel %vm114, %v50, 0
    %v119 = vsel %vm114, %v51, 0
    %v122 = vsel %vm114, %v52, 0
    %v125 = vsel %vm114, %v53, 0
    %127 = vmatprep.subr.bf16.mxu0 0
    %128 = vmatpush1.bf16.msra.mxu0 0
    %129 = vmatprep.subr.bf16.mxu0 0
    %130 = vmatpush1.bf16.msra.mxu0 0
    %131 = vmatprep.subr.bf16.mxu0 0
    %132 = vmatpush1.bf16.msra.mxu0 0
    %133 = vmatprep.subr.bf16.mxu0 0
    %134 = vmatpush1.bf16.msra.mxu0 0
    %135 = vmatprep.subr.bf16.mxu0 %v105
    %136 = vmatpush1.bf16.msra.mxu0 %v104
    %137 = vmatprep.subr.bf16.mxu0 %v103
    %138 = vmatpush1.bf16.msra.mxu0 %v102
    %139 = vmatprep.subr.bf16.mxu0 %v101
    %140 = vmatpush1.bf16.msra.mxu0 %v100
    %141 = vmatprep.subr.bf16.mxu0 %v99
    %142 = vmatpush1.bf16.msra.mxu0 %v98
    %143 = vmatprep.subr.bf16.mxu0 0
    %144 = vmatpush2.bf16.msra.mxu0 0
    %145 = vmatprep.subr.bf16.mxu0 0
    %146 = vmatpush2.bf16.msra.mxu0 0
    %147 = vmatprep.subr.bf16.mxu0 0
    %148 = vmatpush2.bf16.msra.mxu0 0
    %149 = vmatprep.subr.bf16.mxu0 0
    %150 = vmatpush2.bf16.msra.mxu0 0
    %151 = vmatprep.subr.bf16.mxu0 0
    %152 = vmatpush2.bf16.msra.mxu0 0
    %153 = vmatprep.subr.bf16.mxu0 0
    %154 = vmatpush2.bf16.msra.mxu0 0
    %155 = vmatprep.subr.bf16.mxu0 0
    %156 = vmatpush2.bf16.msra.mxu0 0
    %157 = vmatprep.subr.bf16.mxu0 0
    %158 = vmatpush2.bf16.msra.mxu0 0
    %159 = vmatprep.mubr.bf16.mxu0 0
    %160 = vmatmul.mubr.bf16.gmra.mxu0 %v116
    %v161 = vpop.f32.mrf.mxu0
    %v162 = vadd.f32 %v67, %v161
    %v163 = vpop.f32.mrf.mxu0
    %v164 = vadd.f32 %v71, %v163
    %v165 = vpop.f32.mrf.mxu0
    %v166 = vadd.f32 %v67, %v165
    %v167 = vpop.f32.mrf.mxu0
    %v168 = vadd.f32 %v71, %v167
    %169 = vmatprep.mubr.bf16.mxu0 0
    %170 = vmatmul.mubr.bf16.gmra.mxu0 %v119
    %v171 = vpop.f32.mrf.mxu0
    %v172 = vadd.f32 %v67, %v171
    %v173 = vpop.f32.mrf.mxu0
    %v174 = vadd.f32 %v71, %v173
    %v175 = vpop.f32.mrf.mxu0
    %v176 = vadd.f32 %v67, %v175
    %v177 = vpop.f32.mrf.mxu0
    %v178 = vadd.f32 %v71, %v177
    %179 = vmatprep.mubr.bf16.mxu0 0
    %180 = vmatmul.mubr.bf16.gmra.mxu0 %v122
    %v181 = vpop.f32.mrf.mxu0
    %v182 = vadd.f32 %v67, %v181
    %v183 = vpop.f32.mrf.mxu0
    %v184 = vadd.f32 %v71, %v183
    %v185 = vpop.f32.mrf.mxu0
    %v186 = vadd.f32 %v67, %v185
    %v187 = vpop.f32.mrf.mxu0
    %v188 = vadd.f32 %v71, %v187
    %189 = vmatprep.mubr.bf16.mxu0 0
    %190 = vmatmul.mubr.bf16.gmra.mxu0 %v125
    %v191 = vpop.f32.mrf.mxu0
    %v192 = vadd.f32 %v67, %v191
    %v193 = vpop.f32.mrf.mxu0
    %v194 = vadd.f32 %v71, %v193
    %v195 = vpop.f32.mrf.mxu0
    %v196 = vadd.f32 %v67, %v195
    %v197 = vpop.f32.mrf.mxu0
    %v198 = vadd.f32 %v71, %v197
    %199 = vdwg.mxu0
    %v200 = vmax.f32 %v162, 0.0
    %v201 = vmax.f32 %v164, 0.0
    %v202 = vmax.f32 %v166, 0.0
    %v203 = vmax.f32 %v168, 0.0
    %v204 = vmax.f32 %v172, 0.0
    %v205 = vmax.f32 %v174, 0.0
    %v206 = vmax.f32 %v176, 0.0
    %v207 = vmax.f32 %v178, 0.0
    %v208 = vmax.f32 %v182, 0.0
    %v209 = vmax.f32 %v184, 0.0
    %v210 = vmax.f32 %v186, 0.0
    %v211 = vmax.f32 %v188, 0.0
    %v212 = vmax.f32 %v192, 0.0
    %v213 = vmax.f32 %v194, 0.0
    %v214 = vmax.f32 %v196, 0.0
    %v215 = vmax.f32 %v198, 0.0
    %v216 = vpack.c.bf16 %v202, %v200
    %v217 = vpack.c.bf16 %v203, %v201
    %v218 = vpack.c.bf16 %v206, %v204
    %v219 = vpack.c.bf16 %v207, %v205
    %v220 = vpack.c.bf16 %v210, %v208
    %v221 = vpack.c.bf16 %v211, %v209
    %v222 = vpack.c.bf16 %v214, %v212
    %v223 = vpack.c.bf16 %v215, %v213
    %v224 = vld [vmem:[#allocation2] sm:$0xff]
    %v225 = vld [vmem:[#allocation2 + $0x8] sm:$0xff]
    %v226 = vld [vmem:[#allocation2 + $0x10] sm:$0xff]
    %v227 = vld [vmem:[#allocation2 + $0x18] sm:$0xff]
    %v228 = vld [vmem:[#allocation2 + $0x20] sm:$0xff]
    %v229 = vld [vmem:[#allocation2 + $0x28] sm:$0xff]
    %v230 = vld [vmem:[#allocation2 + $0x30] sm:$0xff]
    %v231 = vld [vmem:[#allocation2 + $0x38] sm:$0xff]
    %v232 = vld [vmem:[#allocation2 + $0x40] sm:$0xff]
    %v233 = vld [vmem:[#allocation2 + $0x48] sm:$0xff]
    %v234 = vld [vmem:[#allocation2 + $0x50] sm:$0xff]
    %v235 = vld [vmem:[#allocation2 + $0x58] sm:$0xff]
    %v236 = vld [vmem:[#allocation2 + $0x60] sm:$0xff]
    %v237 = vld [vmem:[#allocation2 + $0x68] sm:$0xff]
    %v238 = vld [vmem:[#allocation2 + $0x70] sm:$0xff]
    %v239 = vld [vmem:[#allocation2 + $0x78] sm:$0xff]
    %v240 = vld [vmem:[#allocation2 + $0x80] sm:$0xff]
    %v241 = vld [vmem:[#allocation2 + $0x88] sm:$0xff]
    %v242 = vld [vmem:[#allocation2 + $0x90] sm:$0xff]
    %v243 = vld [vmem:[#allocation2 + $0x98] sm:$0xff]
    %v244 = vld [vmem:[#allocation2 + $0xa0] sm:$0xff]
    %v245 = vld [vmem:[#allocation2 + $0xa8] sm:$0xff]
    %v246 = vld [vmem:[#allocation2 + $0xb0] sm:$0xff]
    %v247 = vld [vmem:[#allocation2 + $0xb8] sm:$0xff]
    %v248 = vld [vmem:[#allocation2 + $0xc0] sm:$0xff]
    %v249 = vld [vmem:[#allocation2 + $0xc8] sm:$0xff]
    %v250 = vld [vmem:[#allocation2 + $0xd0] sm:$0xff]
    %v251 = vld [vmem:[#allocation2 + $0xd8] sm:$0xff]
    %v252 = vld [vmem:[#allocation2 + $0xe0] sm:$0xff]
    %v253 = vld [vmem:[#allocation2 + $0xe8] sm:$0xff]
    %v254 = vld [vmem:[#allocation2 + $0xf0] sm:$0xff]
    %v255 = vld [vmem:[#allocation2 + $0xf8] sm:$0xff]
    %v256 = vld [vmem:[%s4] sm:$0x3]
    %v258 = vlaneseq
    %v259 = vshrl.u32 %v258, 7
    %v260 = vsub.s32 0, %v259
    %v261 = vrot.slane %v256, %v260
    %v262 = vlaneseq
    %v263 = vshrl.u32 %v262, 7
    %v264 = vsub.s32 1, %v263
    %v265 = vrot.slane %v256, %v264
    %v300 = vunpack.c.l.b16 %v224
    %v301 = vunpack.c.h.b16 %v224
    %v302 = vunpack.c.l.b16 %v225
    %v303 = vunpack.c.h.b16 %v225
    %v304 = vunpack.c.l.b16 %v226
    %v305 = vunpack.c.h.b16 %v226
    %v306 = vunpack.c.l.b16 %v227
    %v307 = vunpack.c.h.b16 %v227
    %v308 = vunpack.c.l.b16 %v228
    %v309 = vunpack.c.h.b16 %v228
    %v310 = vunpack.c.l.b16 %v229
    %v311 = vunpack.c.h.b16 %v229
    %v312 = vunpack.c.l.b16 %v230
    %v313 = vunpack.c.h.b16 %v230
    %v314 = vunpack.c.l.b16 %v231
    %v315 = vunpack.c.h.b16 %v231
    %v316 = vunpack.c.l.b16 %v232
    %v317 = vunpack.c.h.b16 %v232
    %v318 = vunpack.c.l.b16 %v233
    %v319 = vunpack.c.h.b16 %v233
    %v320 = vunpack.c.l.b16 %v234
    %v321 = vunpack.c.h.b16 %v234
    %v322 = vunpack.c.l.b16 %v235
    %v323 = vunpack.c.h.b16 %v235
    %v324 = vunpack.c.l.b16 %v236
    %v325 = vunpack.c.h.b16 %v236
    %v326 = vunpack.c.l.b16 %v237
    %v327 = vunpack.c.h.b16 %v237
    %v328 = vunpack.c.l.b16 %v238
    %v329 = vunpack.c.h.b16 %v238
    %v330 = vunpack.c.l.b16 %v239
    %v331 = vunpack.c.h.b16 %v239
    %v332 = vunpack.c.l.b16 %v240
    %v333 = vunpack.c.h.b16 %v240
    %v334 = vunpack.c.l.b16 %v241
    %v335 = vunpack.c.h.b16 %v241
    %v336 = vunpack.c.l.b16 %v242
    %v337 = vunpack.c.h.b16 %v242
    %v338 = vunpack.c.l.b16 %v243
    %v339 = vunpack.c.h.b16 %v243
    %v340 = vunpack.c.l.b16 %v244
    %v341 = vunpack.c.h.b16 %v244
    %v342 = vunpack.c.l.b16 %v245
    %v343 = vunpack.c.h.b16 %v245
    %v344 = vunpack.c.l.b16 %v246
    %v345 = vunpack.c.h.b16 %v246
    %v346 = vunpack.c.l.b16 %v247
    %v347 = vunpack.c.h.b16 %v247
    %v348 = vunpack.c.l.b16 %v248
    %v349 = vunpack.c.h.b16 %v248
    %v350 = vunpack.c.l.b16 %v249
    %v351 = vunpack.c.h.b16 %v249
    %v352 = vunpack.c.l.b16 %v250
    %v353 = vunpack.c.h.b16 %v250
    %v354 = vunpack.c.l.b16 %v251
    %v355 = vunpack.c.h.b16 %v251
    %v356 = vunpack.c.l.b16 %v252
    %v357 = vunpack.c.h.b16 %v252
    %v358 = vunpack.c.l.b16 %v253
    %v359 = vunpack.c.h.b16 %v253
    %v360 = vunpack.c.l.b16 %v254
    %v361 = vunpack.c.h.b16 %v254
    %v362 = vunpack.c.l.b16 %v255
    %v363 = vunpack.c.h.b16 %v255
    %v364 = vpack.c.b16 %v302, %v300
    %v365 = vpack.c.b16 %v303, %v301
    %v366 = vpack.c.b16 %v306, %v304
    %v367 = vpack.c.b16 %v307, %v305
    %v368 = vpack.c.b16 %v310, %v308
    %v369 = vpack.c.b16 %v311, %v309
    %v370 = vpack.c.b16 %v314, %v312
    %v371 = vpack.c.b16 %v315, %v313
    %v372 = vpack.c.b16 %v318, %v316
    %v373 = vpack.c.b16 %v319, %v317
    %v374 = vpack.c.b16 %v322, %v320
    %v375 = vpack.c.b16 %v323, %v321
    %v376 = vpack.c.b16 %v326, %v324
    %v377 = vpack.c.b16 %v327, %v325
    %v378 = vpack.c.b16 %v330, %v328
    %v379 = vpack.c.b16 %v331, %v329
    %v380 = vpack.c.b16 %v334, %v332
    %v381 = vpack.c.b16 %v335, %v333
    %v382 = vpack.c.b16 %v338, %v336
    %v383 = vpack.c.b16 %v339, %v337
    %v384 = vpack.c.b16 %v342, %v340
    %v385 = vpack.c.b16 %v343, %v341
    %v386 = vpack.c.b16 %v346, %v344
    %v387 = vpack.c.b16 %v347, %v345
    %v388 = vpack.c.b16 %v350, %v348
    %v389 = vpack.c.b16 %v351, %v349
    %v390 = vpack.c.b16 %v354, %v352
    %v391 = vpack.c.b16 %v355, %v353
    %v392 = vpack.c.b16 %v358, %v356
    %v393 = vpack.c.b16 %v359, %v357
    %v394 = vpack.c.b16 %v362, %v360
    %v395 = vpack.c.b16 %v363, %v361
    %428 = vmatprep.subr.bf16.mxu0 %v379
    %429 = vmatpush1.bf16.msra.mxu0 %v378
    %430 = vmatprep.subr.bf16.mxu0 %v377
    %431 = vmatpush1.bf16.msra.mxu0 %v376
    %432 = vmatprep.subr.bf16.mxu0 %v375
    %433 = vmatpush1.bf16.msra.mxu0 %v374
    %434 = vmatprep.subr.bf16.mxu0 %v373
    %435 = vmatpush1.bf16.msra.mxu0 %v372
    %436 = vmatprep.subr.bf16.mxu0 %v371
    %437 = vmatpush1.bf16.msra.mxu0 %v370
    %438 = vmatprep.subr.bf16.mxu0 %v369
    %439 = vmatpush1.bf16.msra.mxu0 %v368
    %440 = vmatprep.subr.bf16.mxu0 %v367
    %441 = vmatpush1.bf16.msra.mxu0 %v366
    %442 = vmatprep.subr.bf16.mxu0 %v365
    %443 = vmatpush1.bf16.msra.mxu0 %v364
    %444 = vmatprep.subr.bf16.mxu0 %v395
    %445 = vmatpush2.bf16.msra.mxu0 %v394
    %446 = vmatprep.subr.bf16.mxu0 %v393
    %447 = vmatpush2.bf16.msra.mxu0 %v392
    %448 = vmatprep.subr.bf16.mxu0 %v391
    %449 = vmatpush2.bf16.msra.mxu0 %v390
    %450 = vmatprep.subr.bf16.mxu0 %v389
    %451 = vmatpush2.bf16.msra.mxu0 %v388
    %452 = vmatprep.subr.bf16.mxu0 %v387
    %453 = vmatpush2.bf16.msra.mxu0 %v386
    %454 = vmatprep.subr.bf16.mxu0 %v385
    %455 = vmatpush2.bf16.msra.mxu0 %v384
    %456 = vmatprep.subr.bf16.mxu0 %v383
    %457 = vmatpush2.bf16.msra.mxu0 %v382
    %458 = vmatprep.subr.bf16.mxu0 %v381
    %459 = vmatpush2.bf16.msra.mxu0 %v380
    %460 = vmatprep.mubr.bf16.mxu0 %v217
    %461 = vmatmul.mubr.bf16.gmra.mxu0 %v216
    %v462 = vpop.f32.mrf.mxu0
    %v463 = vadd.f32 %v261, %v462
    %v464 = vpop.f32.mrf.mxu0
    %v465 = vadd.f32 %v265, %v464
    %v466 = vpop.f32.mrf.mxu0
    %v467 = vadd.f32 %v261, %v466
    %v468 = vpop.f32.mrf.mxu0
    %v469 = vadd.f32 %v265, %v468
    %470 = vmatprep.mubr.bf16.mxu0 %v219
    %471 = vmatmul.mubr.bf16.gmra.mxu0 %v218
    %v472 = vpop.f32.mrf.mxu0
    %v473 = vadd.f32 %v261, %v472
    %v474 = vpop.f32.mrf.mxu0
    %v475 = vadd.f32 %v265, %v474
    %v476 = vpop.f32.mrf.mxu0
    %v477 = vadd.f32 %v261, %v476
    %v478 = vpop.f32.mrf.mxu0
    %v479 = vadd.f32 %v265, %v478
    %480 = vmatprep.mubr.bf16.mxu0 %v221
    %481 = vmatmul.mubr.bf16.gmra.mxu0 %v220
    %v482 = vpop.f32.mrf.mxu0
    %v483 = vadd.f32 %v261, %v482
    %v484 = vpop.f32.mrf.mxu0
    %v485 = vadd.f32 %v265, %v484
    %v486 = vpop.f32.mrf.mxu0
    %v487 = vadd.f32 %v261, %v486
    %v488 = vpop.f32.mrf.mxu0
    %v489 = vadd.f32 %v265, %v488
    %490 = vmatprep.mubr.bf16.mxu0 %v223
    %491 = vmatmul.mubr.bf16.gmra.mxu0 %v222
    %v492 = vpop.f32.mrf.mxu0
    %v493 = vadd.f32 %v261, %v492
    %v494 = vpop.f32.mrf.mxu0
    %v495 = vadd.f32 %v265, %v494
    %v496 = vpop.f32.mrf.mxu0
    %v497 = vadd.f32 %v261, %v496
    %v498 = vpop.f32.mrf.mxu0
    %v499 = vadd.f32 %v265, %v498
    %500 = vdwg.mxu0
    %v501 = vmax.f32 %v463, 0.0
    %v502 = vmax.f32 %v465, 0.0
    %v503 = vmax.f32 %v467, 0.0
    %v504 = vmax.f32 %v469, 0.0
    %v505 = vmax.f32 %v473, 0.0
    %v506 = vmax.f32 %v475, 0.0
    %v507 = vmax.f32 %v477, 0.0
    %v508 = vmax.f32 %v479, 0.0
    %v509 = vmax.f32 %v483, 0.0
    %v510 = vmax.f32 %v485, 0.0
    %v511 = vmax.f32 %v487, 0.0
    %v512 = vmax.f32 %v489, 0.0
    %v513 = vmax.f32 %v493, 0.0
    %v514 = vmax.f32 %v495, 0.0
    %v515 = vmax.f32 %v497, 0.0
    %v516 = vmax.f32 %v499, 0.0
    %v517 = vpack.c.bf16 %v503, %v501
    %v518 = vpack.c.bf16 %v504, %v502
    %v519 = vpack.c.bf16 %v507, %v505
    %v520 = vpack.c.bf16 %v508, %v506
    %v521 = vpack.c.bf16 %v511, %v509
    %v522 = vpack.c.bf16 %v512, %v510
    %v523 = vpack.c.bf16 %v515, %v513
    %v524 = vpack.c.bf16 %v516, %v514
    %v525 = vld [vmem:[%s5] sm:$0xf]
    %v526 = vld [vmem:[%s5 + $0x4] sm:$0xf]
    %v527 = vld [vmem:[%s5 + $0x8] sm:$0xf]
    %v528 = vld [vmem:[%s5 + $0xc] sm:$0xf]
    %v529 = vld [vmem:[%s5 + $0x10] sm:$0xf]
    %v530 = vld [vmem:[%s5 + $0x14] sm:$0xf]
    %v531 = vld [vmem:[%s5 + $0x18] sm:$0xf]
    %v532 = vld [vmem:[%s5 + $0x1c] sm:$0xf]
    %v533 = vld [vmem:[%s5 + $0x20] sm:$0xf]
    %v534 = vld [vmem:[%s5 + $0x24] sm:$0xf]
    %v535 = vld [vmem:[%s5 + $0x28] sm:$0xf]
    %v536 = vld [vmem:[%s5 + $0x2c] sm:$0xf]
    %v537 = vld [vmem:[%s5 + $0x30] sm:$0xf]
    %v538 = vld [vmem:[%s5 + $0x34] sm:$0xf]
    %v539 = vld [vmem:[%s5 + $0x38] sm:$0xf]
    %v540 = vld [vmem:[%s5 + $0x3c] sm:$0xf]
    %v541 = vld [vmem:[%s5 + $0x40] sm:$0xf]
    %v542 = vld [vmem:[%s5 + $0x44] sm:$0xf]
    %v543 = vld [vmem:[%s5 + $0x48] sm:$0xf]
    %v544 = vld [vmem:[%s5 + $0x4c] sm:$0xf]
    %v545 = vld [vmem:[%s5 + $0x50] sm:$0xf]
    %v546 = vld [vmem:[%s5 + $0x54] sm:$0xf]
    %v547 = vld [vmem:[%s5 + $0x58] sm:$0xf]
    %v548 = vld [vmem:[%s5 + $0x5c] sm:$0xf]
    %v549 = vld [vmem:[%s5 + $0x60] sm:$0xf]
    %v550 = vld [vmem:[%s5 + $0x64] sm:$0xf]
    %v551 = vld [vmem:[%s5 + $0x68] sm:$0xf]
    %v552 = vld [vmem:[%s5 + $0x6c] sm:$0xf]
    %v553 = vld [vmem:[%s5 + $0x70] sm:$0xf]
    %v554 = vld [vmem:[%s5 + $0x74] sm:$0xf]
    %v555 = vld [vmem:[%s5 + $0x78] sm:$0xf]
    %v556 = vld [vmem:[%s5 + $0x7c] sm:$0xf]
    %v557 = vld [vmem:[%s6] sm:$0x1]
    %v559 = vlaneseq
    %v560 = vshrl.u32 %v559, 7
    %v561 = vsub.s32 0, %v560
    %v562 = vrot.slane %v557, %v561
    %v596 = vunpack.c.l.b16 %v525
    %v597 = vunpack.c.l.b16 %v526
    %v598 = vunpack.c.l.b16 %v527
    %v599 = vunpack.c.l.b16 %v528
    %v600 = vunpack.c.l.b16 %v529
    %v601 = vunpack.c.l.b16 %v530
    %v602 = vunpack.c.l.b16 %v531
    %v603 = vunpack.c.l.b16 %v532
    %v604 = vunpack.c.l.b16 %v533
    %v605 = vunpack.c.l.b16 %v534
    %v606 = vunpack.c.l.b16 %v535
    %v607 = vunpack.c.l.b16 %v536
    %v608 = vunpack.c.l.b16 %v537
    %v609 = vunpack.c.l.b16 %v538
    %v610 = vunpack.c.l.b16 %v539
    %v611 = vunpack.c.l.b16 %v540
    %v612 = vunpack.c.l.b16 %v541
    %v613 = vunpack.c.l.b16 %v542
    %v614 = vunpack.c.l.b16 %v543
    %v615 = vunpack.c.l.b16 %v544
    %v616 = vunpack.c.l.b16 %v545
    %v617 = vunpack.c.l.b16 %v546
    %v618 = vunpack.c.l.b16 %v547
    %v619 = vunpack.c.l.b16 %v548
    %v620 = vunpack.c.l.b16 %v549
    %v621 = vunpack.c.l.b16 %v550
    %v622 = vunpack.c.l.b16 %v551
    %v623 = vunpack.c.l.b16 %v552
    %v624 = vunpack.c.l.b16 %v553
    %v625 = vunpack.c.l.b16 %v554
    %v626 = vunpack.c.l.b16 %v555
    %v627 = vunpack.c.l.b16 %v556
    %v628 = vpack.c.b16 %v597, %v596
    %v629 = vpack.c.b16 %v599, %v598
    %v630 = vpack.c.b16 %v601, %v600
    %v631 = vpack.c.b16 %v603, %v602
    %v632 = vpack.c.b16 %v605, %v604
    %v633 = vpack.c.b16 %v607, %v606
    %v634 = vpack.c.b16 %v609, %v608
    %v635 = vpack.c.b16 %v611, %v610
    %v636 = vpack.c.b16 %v613, %v612
    %v637 = vpack.c.b16 %v615, %v614
    %v638 = vpack.c.b16 %v617, %v616
    %v639 = vpack.c.b16 %v619, %v618
    %v640 = vpack.c.b16 %v621, %v620
    %v641 = vpack.c.b16 %v623, %v622
    %v642 = vpack.c.b16 %v625, %v624
    %v643 = vpack.c.b16 %v627, %v626
    %660 = vmatprep.subr.bf16.mxu0 0
    %661 = vmatpush1.bf16.msra.mxu0 %v635
    %662 = vmatprep.subr.bf16.mxu0 0
    %663 = vmatpush1.bf16.msra.mxu0 %v634
    %664 = vmatprep.subr.bf16.mxu0 0
    %665 = vmatpush1.bf16.msra.mxu0 %v633
    %666 = vmatprep.subr.bf16.mxu0 0
    %667 = vmatpush1.bf16.msra.mxu0 %v632
    %668 = vmatprep.subr.bf16.mxu0 0
    %669 = vmatpush1.bf16.msra.mxu0 %v631
    %670 = vmatprep.subr.bf16.mxu0 0
    %671 = vmatpush1.bf16.msra.mxu0 %v630
    %672 = vmatprep.subr.bf16.mxu0 0
    %673 = vmatpush1.bf16.msra.mxu0 %v629
    %674 = vmatprep.subr.bf16.mxu0 0
    %675 = vmatpush1.bf16.msra.mxu0 %v628
    %676 = vmatprep.subr.bf16.mxu0 0
    %677 = vmatpush2.bf16.msra.mxu0 %v643
    %678 = vmatprep.subr.bf16.mxu0 0
    %679 = vmatpush2.bf16.msra.mxu0 %v642
    %680 = vmatprep.subr.bf16.mxu0 0
    %681 = vmatpush2.bf16.msra.mxu0 %v641
    %682 = vmatprep.subr.bf16.mxu0 0
    %683 = vmatpush2.bf16.msra.mxu0 %v640
    %684 = vmatprep.subr.bf16.mxu0 0
    %685 = vmatpush2.bf16.msra.mxu0 %v639
    %686 = vmatprep.subr.bf16.mxu0 0
    %687 = vmatpush2.bf16.msra.mxu0 %v638
    %688 = vmatprep.subr.bf16.mxu0 0
    %689 = vmatpush2.bf16.msra.mxu0 %v637
    %690 = vmatprep.subr.bf16.mxu0 0
    %691 = vmatpush2.bf16.msra.mxu0 %v636
    %692 = vmatprep.mubr.bf16.mxu0 %v518
    %693 = vmatmul.mubr.bf16.gmra.mxu0 %v517
    %v694 = vpop.f32.mrf.mxu0
    %v695 = vadd.f32 %v562, %v694
    %v696 = vpop.f32.mrf.mxu0
    %v697 = vpop.f32.mrf.mxu0
    %v698 = vadd.f32 %v562, %v697
    %v699 = vpop.f32.mrf.mxu0
    %700 = vmatprep.mubr.bf16.mxu0 %v520
    %701 = vmatmul.mubr.bf16.gmra.mxu0 %v519
    %v702 = vpop.f32.mrf.mxu0
    %v703 = vadd.f32 %v562, %v702
    %v704 = vpop.f32.mrf.mxu0
    %v705 = vpop.f32.mrf.mxu0
    %v706 = vadd.f32 %v562, %v705
    %v707 = vpop.f32.mrf.mxu0
    %708 = vmatprep.mubr.bf16.mxu0 %v522
    %709 = vmatmul.mubr.bf16.gmra.mxu0 %v521
    %v710 = vpop.f32.mrf.mxu0
    %v711 = vadd.f32 %v562, %v710
    %v712 = vpop.f32.mrf.mxu0
    %v713 = vpop.f32.mrf.mxu0
    %v714 = vadd.f32 %v562, %v713
    %v715 = vpop.f32.mrf.mxu0
    %716 = vmatprep.mubr.bf16.mxu0 %v524
    %717 = vmatmul.mubr.bf16.gmra.mxu0 %v523
    %v718 = vpop.f32.mrf.mxu0
    %v719 = vadd.f32 %v562, %v718
    %v720 = vpop.f32.mrf.mxu0
    %v721 = vpop.f32.mrf.mxu0
    %v722 = vadd.f32 %v562, %v721
    %v723 = vpop.f32.mrf.mxu0
    %724 = vdwg.mxu0
    %725 = vst.msk [vmem:[#allocation5] sm:$0xff] %vm114, %v695
    %726 = vst.msk [vmem:[#allocation5 + $0x8] sm:$0xff] %vm114, %v698
    %727 = vst.msk [vmem:[#allocation5 + $0x10] sm:$0xff] %vm114, %v703
    %728 = vst.msk [vmem:[#allocation5 + $0x18] sm:$0xff] %vm114, %v706
    %729 = vst.msk [vmem:[#allocation5 + $0x20] sm:$0xff] %vm114, %v711
    %730 = vst.msk [vmem:[#allocation5 + $0x28] sm:$0xff] %vm114, %v714
    %731 = vst.msk [vmem:[#allocation5 + $0x30] sm:$0xff] %vm114, %v719
    %732 = vst.msk [vmem:[#allocation5 + $0x38] sm:$0xff] %vm114, %v722
    // Predicated region
    $region34: #{tpu_custom_call.1} parent=1 // pred_check
      _
    $region35: #{tpu_custom_call.1} parent=1 // pred_check_branch
      %734 = sbr.rel (0) target = $region37
    $region36: #{tpu_custom_call.1} parent=1 // pred_region
      %s736 = ssub.s32 1024, 1024
      %737 = vsyncadd [#allocation4], %s736
      %s738 = sshll.u32 [#allocation5], 4
      %s739 = int_to_ptr.vmem [resolvable:$true] %s738
      %744 = dma.vmem_to_hbm [thread:$0]  %s739, 1024, %s7, [#allocation4], 128, 128, 8
    $region37: #{tpu_custom_call.1} parent=1 // pred_fallthru
      _
    // Predicated region
    $region38: #{tpu_custom_call.1} parent=1 // pred_check
      _
    $region39: #{tpu_custom_call.1} parent=1 // pred_check_branch
      %746 = sbr.rel (0) target = $region41
    $region40: #{tpu_custom_call.1} parent=1 // pred_region
      %747 = dma.done [#allocation4], 1024
    $region41: #{tpu_custom_call.1} parent=1 // pred_fallthru
      _
    %748 = vsyncpa [#allocation3], 1
    %749 = vsyncpa [#allocation4], 1

</llo_original>
